<compile_context>
chip_gen: v6e
topology: v6e:2x2x1
jax: 0.10.0
libtpu: 0.0.40
codegen_flags: <defaults>
</compile_context>

<pallas_src>
from typing import NamedTuple

import jax
import jax.numpy as jnp
from jax.experimental import pallas as pl
from jax.experimental.pallas import tpu as pltpu

_LANE = 128
_BF16_PACK = 16  # bf16 packs 16 rows per sublane group


def _round_up(n: int, m: int) -> int:
    return ((n + m - 1) // m) * m


class QNetParams(NamedTuple):
    """Inference-ready (padded, bf16) parameters produced once by prepare_qnet_params."""
    w1: jax.Array   # (in_dim, hidden_p)  bf16, zero-padded columns
    b1: jax.Array   # (1, hidden_p)       f32,  zero-padded columns
    w2: jax.Array   # (hidden_p, out_p)   bf16, zero-padded rows/cols
    b2: jax.Array   # (1, out_p)          f32,  zero-padded columns
    out_dim: int    # true number of output features


def _qnet_kernel(x_ref, w1_ref, b1_ref, w2_ref, b2_ref, o_ref):
    # Cast x to bf16 in-kernel (VPU cast, hidden under the MXU slot); both matmuls
    # run bf16 x bf16 -> f32 accumulation on the MXU; bias-add / ReLU stay in f32.
    x = x_ref[...].astype(jnp.bfloat16)
    h = jnp.dot(x, w1_ref[...], preferred_element_type=jnp.float32)
    h = jnp.maximum(h + b1_ref[...], 0.0)
    out = jnp.dot(h.astype(jnp.bfloat16), w2_ref[...],
                  preferred_element_type=jnp.float32)
    # Lane-dense bf16 store (half the writeback of f32, still unmasked vst).
    o_ref[...] = (out + b2_ref[...]).astype(o_ref.dtype)


def prepare_qnet_params(w1, b1, w2, b2) -> QNetParams:
    """One-time prep: pad feature dims to 128-lane multiples, cast weights to bf16.

    Weight layout is transposed vs. PyTorch's (out, in):
      w1 : (in_dim, hidden)   b1 : (hidden,)
      w2 : (hidden, out_dim)  b2 : (out_dim,)
    """
    in_dim, hidden = w1.shape
    out_dim = w2.shape[1]
    hidden_p = _round_up(hidden, _LANE)
    out_p = _round_up(out_dim, _LANE)

    w1_p = jnp.zeros((in_dim, hidden_p), jnp.bfloat16).at[:, :hidden].set(
        w1.astype(jnp.bfloat16))
    b1_p = jnp.zeros((1, hidden_p), jnp.float32).at[:, :hidden].set(
        b1.astype(jnp.float32).reshape(1, hidden))
    w2_p = jnp.zeros((hidden_p, out_p), jnp.bfloat16).at[:hidden, :out_dim].set(
        w2.astype(jnp.bfloat16))
    b2_p = jnp.zeros((1, out_p), jnp.float32).at[:, :out_dim].set(
        b2.astype(jnp.float32).reshape(1, out_dim))
    return QNetParams(w1_p, b1_p, w2_p, b2_p, out_dim)


def _choose_batch_tile(B: int, block_b: int) -> tuple[int, int]:
    """Pick (tb, padded_B): tb a multiple of 16, >=2 grid steps whenever B > 16."""
    tb = min(_round_up(block_b, _BF16_PACK), _round_up(B, _BF16_PACK))
    b_p = _round_up(B, tb)
    if b_p // tb < 2 and B > _BF16_PACK:
        # Split so v7x's two TensorCores both get work under the "parallel" axis.
        tb = _round_up(pl.cdiv(B, 2), _BF16_PACK)
        b_p = _round_up(B, tb)
    return tb, b_p


def linear_qnet_forward(x, params: QNetParams, *, block_b: int = 1024):
    """Forward pass of Linear_QNet: relu(x @ w1 + b1) @ w2 + b2.

    x : (B, in_dim); params from prepare_qnet_params.  Returns (B, out_dim), x.dtype.
    """
    B, in_dim = x.shape
    hidden_p = params.w1.shape[1]
    out_p = params.w2.shape[1]
    out_dim = params.out_dim

    tb, b_p = _choose_batch_tile(B, block_b)

    # Only the batch axis ever needs padding; x keeps its native dtype (cast in-kernel).
    x_in = x if b_p == B else jnp.pad(x, ((0, b_p - B), (0, 0)))

    flops = 2 * b_p * (in_dim * hidden_p + hidden_p * out_p)
    bytes_accessed = (b_p * in_dim * x.dtype.itemsize          # x, streamed once
                      + params.w1.size * 2 + params.w2.size * 2
                      + params.b1.size * 4 + params.b2.size * 4
                      + b_p * out_p * 2)                       # bf16 writeback

    out_padded = pl.pallas_call(
        _qnet_kernel,
        out_shape=jax.ShapeDtypeStruct((b_p, out_p), jnp.bfloat16),
        grid=(b_p // tb,),
        in_specs=[
            pl.BlockSpec((tb, in_dim), lambda i: (i, 0)),        # x tile, pipelined
            pl.BlockSpec((in_dim, hidden_p), lambda i: (0, 0)),  # w1 resident
            pl.BlockSpec((1, hidden_p), lambda i: (0, 0)),       # b1 resident
            pl.BlockSpec((hidden_p, out_p), lambda i: (0, 0)),   # w2 resident
            pl.BlockSpec((1, out_p), lambda i: (0, 0)),          # b2 resident
        ],
        out_specs=pl.BlockSpec((tb, out_p), lambda i: (i, 0)),
        compiler_params=pltpu.CompilerParams(
            dimension_semantics=("parallel",),   # v7x dual-TC sharding; no-op on v5e/v6e
        ),
        cost_estimate=pl.CostEstimate(
            flops=int(flops), transcendentals=0, bytes_accessed=int(bytes_accessed)),
    )(x_in, params.w1, params.b1, params.w2, params.b2)

    return out_padded[:B, :out_dim].astype(x.dtype)


def init_qnet_params(key, input_size, hidden_size, output_size, dtype=jnp.float32):
    """Matches PyTorch nn.Linear default init: U(-1/sqrt(fan_in), 1/sqrt(fan_in))."""
    k1, k2, k3, k4 = jax.random.split(key, 4)
    bound1 = 1.0 / (input_size ** 0.5)
    bound2 = 1.0 / (hidden_size ** 0.5)
    # Weights stored transposed relative to PyTorch's (out, in) layout.
    w1 = jax.random.uniform(k1, (input_size, hidden_size), dtype, -bound1, bound1)
    b1 = jax.random.uniform(k2, (hidden_size,), dtype, -bound1, bound1)
    w2 = jax.random.uniform(k3, (hidden_size, output_size), dtype, -bound2, bound2)
    b2 = jax.random.uniform(k4, (output_size,), dtype, -bound2, bound2)
    return w1, b1, w2, b2


def reference_forward_bf16(x, w1, b1, w2, b2):
    """Reference with the same bf16-operand / f32-accumulate / bf16-store numerics."""
    xb = x.astype(jnp.bfloat16).astype(jnp.float32)
    w1b = w1.astype(jnp.bfloat16).astype(jnp.float32)
    w2b = w2.astype(jnp.bfloat16).astype(jnp.float32)
    h = jnp.maximum(xb @ w1b + b1.astype(jnp.float32), 0.0)
    hb = h.astype(jnp.bfloat16).astype(jnp.float32)
    out = hb @ w2b + b2.astype(jnp.float32)
    return out.astype(jnp.bfloat16).astype(x.dtype)


def reference_forward_f32(x, w1, b1, w2, b2):
    h = jnp.maximum(x @ w1 + b1, 0.0)
    return h @ w2 + b2


if __name__ == "__main__":
    key = jax.random.PRNGKey(0)
    k_x, k_x2, k_p = jax.random.split(key, 3)

    input_size, hidden_size, output_size = 16, 32, 4
    w1, b1, w2, b2 = init_qnet_params(k_p, input_size, hidden_size, output_size)
    params = prepare_qnet_params(w1, b1, w2, b2)   # one-time pad + bf16 cast

    # Small batch (single grid step).
    batch = 8
    x = jax.random.normal(k_x, (batch, input_size), dtype=jnp.float32)
    out = jax.block_until_ready(linear_qnet_forward(x, params))
    assert out.shape == (batch, output_size)
    assert out.dtype == x.dtype
    assert jnp.allclose(out, reference_forward_bf16(x, w1, b1, w2, b2),
                        atol=5e-3, rtol=1e-2), "mismatch vs bf16-matched ref"
    assert jnp.allclose(out, reference_forward_f32(x, w1, b1, w2, b2),
                        atol=3e-2, rtol=3e-2), "mismatch vs f32 ref"

    # Larger, non-aligned batch: exercises row padding and the >=2-grid-step path.
    batch2 = 300
    x2 = jax.random.normal(k_x2, (batch2, input_size), dtype=jnp.float32)
    out2 = jax.block_until_ready(linear_qnet_forward(x2, params))
    assert out2.shape == (batch2, output_size)
    assert jnp.allclose(out2, reference_forward_bf16(x2, w1, b1, w2, b2),
                        atol=5e-3, rtol=1e-2), "mismatch vs bf16-matched ref (B=300)"
    assert jnp.allclose(out2, reference_forward_f32(x2, w1, b1, w2, b2),
                        atol=3e-2, rtol=3e-2), "mismatch vs f32 ref (B=300)"

    print("KERNEL_OK")
</pallas_src>

<mosaic_0001>
module attributes {stable_mosaic.version = 11 : i64} {
  func.func @_qnet_kernel(%arg0: i32, %arg1: memref<16x16xf32, #tpu.memory_space<vmem>>, %arg2: memref<16x128xbf16, #tpu.memory_space<vmem>>, %arg3: memref<1x128xf32, #tpu.memory_space<vmem>>, %arg4: memref<128x128xbf16, #tpu.memory_space<vmem>>, %arg5: memref<1x128xf32, #tpu.memory_space<vmem>>, %arg6: memref<16x128xbf16, #tpu.memory_space<vmem>>) attributes {dimension_semantics = [#tpu.dimension_semantics<parallel>], iteration_bounds = array<i64: 1>, scalar_prefetch = 0 : i64, scratch_operands = 0 : i64, tpu.core_type = #tpu.core_type<tc>, window_params = [{transform_indices = @transform_0, window_bounds = array<i64: 16, 16>}, {pipeline_mode = #tpu.pipeline_mode<synchronous>, transform_indices = @transform_1, window_bounds = array<i64: 16, 128>}, {pipeline_mode = #tpu.pipeline_mode<synchronous>, transform_indices = @transform_2, window_bounds = array<i64: 1, 128>}, {pipeline_mode = #tpu.pipeline_mode<synchronous>, transform_indices = @transform_3, window_bounds = array<i64: 128, 128>}, {pipeline_mode = #tpu.pipeline_mode<synchronous>, transform_indices = @transform_4, window_bounds = array<i64: 1, 128>}, {transform_indices = @transform_5, window_bounds = array<i64: 16, 128>}]} {
    %c0 = arith.constant 0 : index
    %c0_0 = arith.constant 0 : index
    %0 = vector.load %arg1[%c0, %c0_0] : memref<16x16xf32, #tpu.memory_space<vmem>>, vector<16x16xf32>
    %1 = arith.truncf %0 : vector<16x16xf32> to vector<16x16xbf16>
    %c0_1 = arith.constant 0 : index
    %c0_2 = arith.constant 0 : index
    %2 = vector.load %arg2[%c0_1, %c0_2] : memref<16x128xbf16, #tpu.memory_space<vmem>>, vector<16x128xbf16>
    %cst = arith.constant dense<0.000000e+00> : vector<16x128xf32>
    %3 = tpu.matmul %1, %2, %cst {dimension_numbers = #tpu.dot_dimension_numbers<[1], [0], [0], [1], [0, 0, 1, 1], [], []>} : vector<16x16xbf16>, vector<16x128xbf16>, vector<16x128xf32> -> vector<16x128xf32>
    %c0_3 = arith.constant 0 : index
    %c0_4 = arith.constant 0 : index
    %4 = vector.load %arg3[%c0_3, %c0_4] : memref<1x128xf32, #tpu.memory_space<vmem>>, vector<1x128xf32>
    %5 = vector.broadcast %4 : vector<1x128xf32> to vector<16x128xf32>
    %6 = arith.addf %3, %5 : vector<16x128xf32>
    %cst_5 = arith.constant 0.000000e+00 : f32
    %7 = vector.broadcast %cst_5 : f32 to vector<16x128xf32>
    %8 = arith.maximumf %6, %7 : vector<16x128xf32>
    %9 = arith.truncf %8 : vector<16x128xf32> to vector<16x128xbf16>
    %c0_6 = arith.constant 0 : index
    %c0_7 = arith.constant 0 : index
    %10 = vector.load %arg4[%c0_6, %c0_7] : memref<128x128xbf16, #tpu.memory_space<vmem>>, vector<128x128xbf16>
    %cst_8 = arith.constant dense<0.000000e+00> : vector<16x128xf32>
    %11 = tpu.matmul %9, %10, %cst_8 {dimension_numbers = #tpu.dot_dimension_numbers<[1], [0], [0], [1], [0, 0, 1, 1], [], []>} : vector<16x128xbf16>, vector<128x128xbf16>, vector<16x128xf32> -> vector<16x128xf32>
    %c0_9 = arith.constant 0 : index
    %c0_10 = arith.constant 0 : index
    %12 = vector.load %arg5[%c0_9, %c0_10] : memref<1x128xf32, #tpu.memory_space<vmem>>, vector<1x128xf32>
    %13 = vector.broadcast %12 : vector<1x128xf32> to vector<16x128xf32>
    %14 = arith.addf %11, %13 : vector<16x128xf32>
    %15 = arith.truncf %14 : vector<16x128xf32> to vector<16x128xbf16>
    %c0_11 = arith.constant 0 : index
    %c0_12 = arith.constant 0 : index
    %16 = vector.load %arg6[%c0_11, %c0_12] : memref<16x128xbf16, #tpu.memory_space<vmem>>, vector<16x128xbf16>
    tpu.vector_store %arg6[%c0_11, %c0_12], %15 {strides = array<i32>} : memref<16x128xbf16, #tpu.memory_space<vmem>>, vector<16x128xbf16>,
    return
  }
  func.func @transform_0(%arg0: i32) -> (i32, i32) {
    %c0_i32 = arith.constant 0 : i32
    %c0_i32_0 = arith.constant 0 : i32
    return %arg0, %c0_i32 : i32, i32
  }
  func.func @transform_1(%arg0: i32) -> (i32, i32) {
    %c0_i32 = arith.constant 0 : i32
    %c0_i32_0 = arith.constant 0 : i32
    %c0_i32_1 = arith.constant 0 : i32
    return %c0_i32, %c0_i32_0 : i32, i32
  }
  func.func @transform_2(%arg0: i32) -> (i32, i32) {
    %c0_i32 = arith.constant 0 : i32
    %c0_i32_0 = arith.constant 0 : i32
    %c0_i32_1 = arith.constant 0 : i32
    return %c0_i32, %c0_i32_0 : i32, i32
  }
  func.func @transform_3(%arg0: i32) -> (i32, i32) {
    %c0_i32 = arith.constant 0 : i32
    %c0_i32_0 = arith.constant 0 : i32
    %c0_i32_1 = arith.constant 0 : i32
    return %c0_i32, %c0_i32_0 : i32, i32
  }
  func.func @transform_4(%arg0: i32) -> (i32, i32) {
    %c0_i32 = arith.constant 0 : i32
    %c0_i32_0 = arith.constant 0 : i32
    %c0_i32_1 = arith.constant 0 : i32
    return %c0_i32, %c0_i32_0 : i32, i32
  }
  func.func @transform_5(%arg0: i32) -> (i32, i32) {
    %c0_i32 = arith.constant 0 : i32
    %c0_i32_0 = arith.constant 0 : i32
    return %arg0, %c0_i32 : i32, i32
  }
}

</mosaic_0001>

<llo_original>
// kernel: tpu_custom_call.1
$region0: #{tpu_custom_call.1}
  #allocation0 [shape = 'u32[]', space=smem, size = 0x4, offset = 0x4, fixed_abs, tag = 'smem constant byte address 0x4 - core index']
  #allocation1 [shape = 'u32[144,128]{1,0:T(1,128)}', space=vmem, size = 0x12000, scoped, tag = 'internal scratch']
  %s0 = inlined_call_operand.hbm [shape: f32[16,16], index: 0, kind: input, shape index: {}]
  %s1 = inlined_call_operand.hbm [shape: bf16[16,128], index: 1, kind: input, shape index: {}]
  %s2 = inlined_call_operand.vmem [shape: f32[1,128], index: 2, kind: input, shape index: {}]
  %s3 = inlined_call_operand.hbm [shape: bf16[128,128], index: 3, kind: input, shape index: {}]
  %s4 = inlined_call_operand.vmem [shape: f32[1,128], index: 4, kind: input, shape index: {}]
  %s5 = inlined_call_operand.hbm [shape: bf16[16,128], index: 5, kind: output, shape index: {}]
  %s6 = sld [smem:[#allocation0]]
  $region42: #{tpu_custom_call.1} parent=0
    _
  %s8 = ssub.s32 1, %s6
  %s9 = scalar_select 0, %s8, %s6
  $region1: #{tpu_custom_call.1} parent=0
    #allocation2 [shape = 'u8[8192]{0}', space=vmem, size = 0x2000, scoped, tag = 'input window, operand 0, single buffered']
    #allocation3 [shape = 's32[1]{0}', space=sflag, size = 0x4, scoped, tag = 'scoped memory for tpu_custom_call.1']
    #allocation4 [shape = 's32[1]{0}', space=sflag, size = 0x4, scoped, tag = 'scoped memory for tpu_custom_call.1']
    #allocation5 [shape = 'u8[4096]{0}', space=vmem, size = 0x1000, scoped, tag = 'input window, operand 1, single buffered']
    #allocation6 [shape = 's32[1]{0}', space=sflag, size = 0x4, scoped, tag = 'scoped memory for tpu_custom_call.1']
    #allocation7 [shape = 'u8[32768]{0}', space=vmem, size = 0x8000, scoped, tag = 'input window, operand 3, single buffered']
    #allocation8 [shape = 'u8[4096]{0}', space=vmem, size = 0x1000, scoped, tag = 'output window, operand 0, single buffered']
    %10 = vsyncpa [#allocation3], 0
    %11 = vsyncpa [#allocation6], 0
    %12 = vsyncpa [#allocation4], 0
    // Predicated region
    $region2: #{tpu_custom_call.1} parent=1 // pred_check
      _
    $region3: #{tpu_custom_call.1} parent=1 // pred_check_branch
      %14 = sbr.rel (0) target = $region5
    $region4: #{tpu_custom_call.1} parent=1 // pred_region
      %s16 = ssub.s32 256, 256
      %17 = vsyncadd [#allocation3], %s16
      %s18 = sshll.u32 [#allocation2], 4
      %s19 = int_to_ptr.vmem [resolvable:$true] %s18
      %24 = dma.hbm_to_vmem [thread:$0]  %s0, 256, %s19, [#allocation3], 128, 128, 8
    $region5: #{tpu_custom_call.1} parent=1 // pred_fallthru
      _
    // Predicated region
    $region6: #{tpu_custom_call.1} parent=1 // pred_check
      _
    $region7: #{tpu_custom_call.1} parent=1 // pred_check_branch
      %26 = sbr.rel (0) target = $region9
    $region8: #{tpu_custom_call.1} parent=1 // pred_region
      %s28 = ssub.s32 128, 128
      %29 = vsyncadd [#allocation6], %s28
      %s30 = sshll.u32 [#allocation5], 4
      %s31 = int_to_ptr.vmem [resolvable:$true] %s30
      %36 = dma.hbm_to_vmem [thread:$0]  %s1, 128, %s31, [#allocation6], 64, 64, 4
    $region9: #{tpu_custom_call.1} parent=1 // pred_fallthru
      _
    // Predicated region
    $region10: #{tpu_custom_call.1} parent=1 // pred_check
      _
    $region11: #{tpu_custom_call.1} parent=1 // pred_check_branch
      %38 = sbr.rel (0) target = $region13
    $region12: #{tpu_custom_call.1} parent=1 // pred_region
      _
    $region13: #{tpu_custom_call.1} parent=1 // pred_fallthru
      _
    // Predicated region
    $region14: #{tpu_custom_call.1} parent=1 // pred_check
      _
    $region15: #{tpu_custom_call.1} parent=1 // pred_check_branch
      %40 = sbr.rel (0) target = $region17
    $region16: #{tpu_custom_call.1} parent=1 // pred_region
      %s42 = ssub.s32 1024, 1024
      %43 = vsyncadd [#allocation6], %s42
      %s44 = sshll.u32 [#allocation7], 4
      %s45 = int_to_ptr.vmem [resolvable:$true] %s44
      %50 = dma.hbm_to_vmem [thread:$0]  %s3, 1024, %s45, [#allocation6], 64, 64, 4
    $region17: #{tpu_custom_call.1} parent=1 // pred_fallthru
      _
    // Predicated region
    $region18: #{tpu_custom_call.1} parent=1 // pred_check
      _
    $region19: #{tpu_custom_call.1} parent=1 // pred_check_branch
      %52 = sbr.rel (0) target = $region21
    $region20: #{tpu_custom_call.1} parent=1 // pred_region
      _
    $region21: #{tpu_custom_call.1} parent=1 // pred_fallthru
      _
    // Predicated region
    $region22: #{tpu_custom_call.1} parent=1 // pred_check
      _
    $region23: #{tpu_custom_call.1} parent=1 // pred_check_branch
      %54 = sbr.rel (0) target = $region25
    $region24: #{tpu_custom_call.1} parent=1 // pred_region
      %55 = dma.done [#allocation3], 256
    $region25: #{tpu_custom_call.1} parent=1 // pred_fallthru
      _
    // Predicated region
    $region26: #{tpu_custom_call.1} parent=1 // pred_check
      _
    $region27: #{tpu_custom_call.1} parent=1 // pred_check_branch
      %57 = sbr.rel (0) target = $region29
    $region28: #{tpu_custom_call.1} parent=1 // pred_region
      %58 = dma.done [#allocation6], 128
    $region29: #{tpu_custom_call.1} parent=1 // pred_fallthru
      _
    // Predicated region
    $region30: #{tpu_custom_call.1} parent=1 // pred_check
      _
    $region31: #{tpu_custom_call.1} parent=1 // pred_check_branch
      %60 = sbr.rel (0) target = $region33
    $region32: #{tpu_custom_call.1} parent=1 // pred_region
      %61 = dma.done [#allocation6], 1024
    $region33: #{tpu_custom_call.1} parent=1 // pred_fallthru
      _
    %v63 = vld [vmem:[#allocation2] sm:$0xff]
    %v64 = vld [vmem:[#allocation2 + $0x8] sm:$0xff]
    %v65 = vpack.c.bf16 %v64, %v63
    %v66 = vld [vmem:[#allocation5] sm:$0xf]
    %v67 = vld [vmem:[#allocation5 + $0x4] sm:$0xf]
    %v68 = vld [vmem:[%s2] sm:$0x1]
    %v70 = vlaneseq
    %v71 = vshrl.u32 %v70, 7
    %v72 = vsub.s32 0, %v71
    %v73 = vrot.slane %v68, %v72
    %v77 = vunpack.c.l.b16 %v66
    %v78 = vunpack.c.l.b16 %v67
    %v79 = vpack.c.b16 %v78, %v77
    %vm81 = vcmask 130048
    %v83 = vsel %vm81, %v65, 0
    %85 = vmatprep.subr.bf16.mxu0 0
    %86 = vmatpush1.bf16.msra.mxu0 0
    %87 = vmatprep.subr.bf16.mxu0 0
    %88 = vmatpush1.bf16.msra.mxu0 0
    %89 = vmatprep.subr.bf16.mxu0 0
    %90 = vmatpush1.bf16.msra.mxu0 0
    %91 = vmatprep.subr.bf16.mxu0 0
    %92 = vmatpush1.bf16.msra.mxu0 0
    %93 = vmatprep.subr.bf16.mxu0 0
    %94 = vmatpush1.bf16.msra.mxu0 0
    %95 = vmatprep.subr.bf16.mxu0 0
    %96 = vmatpush1.bf16.msra.mxu0 0
    %97 = vmatprep.subr.bf16.mxu0 0
    %98 = vmatpush1.bf16.msra.mxu0 0
    %99 = vmatprep.subr.bf16.mxu0 0
    %100 = vmatpush1.bf16.msra.mxu0 %v79
    %101 = vmatprep.subr.bf16.mxu0 0
    %102 = vmatpush2.bf16.msra.mxu0 0
    %103 = vmatprep.subr.bf16.mxu0 0
    %104 = vmatpush2.bf16.msra.mxu0 0
    %105 = vmatprep.subr.bf16.mxu0 0
    %106 = vmatpush2.bf16.msra.mxu0 0
    %107 = vmatprep.subr.bf16.mxu0 0
    %108 = vmatpush2.bf16.msra.mxu0 0
    %109 = vmatprep.subr.bf16.mxu0 0
    %110 = vmatpush2.bf16.msra.mxu0 0
    %111 = vmatprep.subr.bf16.mxu0 0
    %112 = vmatpush2.bf16.msra.mxu0 0
    %113 = vmatprep.subr.bf16.mxu0 0
    %114 = vmatpush2.bf16.msra.mxu0 0
    %115 = vmatprep.subr.bf16.mxu0 0
    %116 = vmatpush2.bf16.msra.mxu0 0
    %117 = vmatprep.mubr.bf16.mxu0 0
    %118 = vmatmul.mubr.bf16.gmra.mxu0 %v83
    %v119 = vpop.f32.mrf.mxu0
    %v120 = vadd.f32 %v73, %v119
    %v121 = vpop.f32.mrf.mxu0
    %v122 = vpop.f32.mrf.mxu0
    %v123 = vadd.f32 %v73, %v122
    %v124 = vpop.f32.mrf.mxu0
    %125 = vdwg.mxu0
    %v126 = vmax.f32 %v120, 0.0
    %v127 = vmax.f32 %v123, 0.0
    %v128 = vpack.c.bf16 %v127, %v126
    %v129 = vld [vmem:[#allocation7] sm:$0xf]
    %v130 = vld [vmem:[#allocation7 + $0x4] sm:$0xf]
    %v131 = vld [vmem:[#allocation7 + $0x8] sm:$0xf]
    %v132 = vld [vmem:[#allocation7 + $0xc] sm:$0xf]
    %v133 = vld [vmem:[#allocation7 + $0x10] sm:$0xf]
    %v134 = vld [vmem:[#allocation7 + $0x14] sm:$0xf]
    %v135 = vld [vmem:[#allocation7 + $0x18] sm:$0xf]
    %v136 = vld [vmem:[#allocation7 + $0x1c] sm:$0xf]
    %v137 = vld [vmem:[#allocation7 + $0x20] sm:$0xf]
    %v138 = vld [vmem:[#allocation7 + $0x24] sm:$0xf]
    %v139 = vld [vmem:[#allocation7 + $0x28] sm:$0xf]
    %v140 = vld [vmem:[#allocation7 + $0x2c] sm:$0xf]
    %v141 = vld [vmem:[#allocation7 + $0x30] sm:$0xf]
    %v142 = vld [vmem:[#allocation7 + $0x34] sm:$0xf]
    %v143 = vld [vmem:[#allocation7 + $0x38] sm:$0xf]
    %v144 = vld [vmem:[#allocation7 + $0x3c] sm:$0xf]
    %v145 = vld [vmem:[%s4] sm:$0x1]
    %v147 = vlaneseq
    %v148 = vshrl.u32 %v147, 7
    %v149 = vsub.s32 0, %v148
    %v150 = vrot.slane %v145, %v149
    %v168 = vunpack.c.l.b16 %v129
    %v169 = vunpack.c.l.b16 %v130
    %v170 = vunpack.c.l.b16 %v131
    %v171 = vunpack.c.l.b16 %v132
    %v172 = vunpack.c.l.b16 %v133
    %v173 = vunpack.c.l.b16 %v134
    %v174 = vunpack.c.l.b16 %v135
    %v175 = vunpack.c.l.b16 %v136
    %v176 = vunpack.c.l.b16 %v137
    %v177 = vunpack.c.l.b16 %v138
    %v178 = vunpack.c.l.b16 %v139
    %v179 = vunpack.c.l.b16 %v140
    %v180 = vunpack.c.l.b16 %v141
    %v181 = vunpack.c.l.b16 %v142
    %v182 = vunpack.c.l.b16 %v143
    %v183 = vunpack.c.l.b16 %v144
    %v184 = vpack.c.b16 %v169, %v168
    %v185 = vpack.c.b16 %v171, %v170
    %v186 = vpack.c.b16 %v173, %v172
    %v187 = vpack.c.b16 %v175, %v174
    %v188 = vpack.c.b16 %v177, %v176
    %v189 = vpack.c.b16 %v179, %v178
    %v190 = vpack.c.b16 %v181, %v180
    %v191 = vpack.c.b16 %v183, %v182
    %200 = vmatprep.subr.bf16.mxu0 0
    %201 = vmatpush1.bf16.msra.mxu0 %v191
    %202 = vmatprep.subr.bf16.mxu0 0
    %203 = vmatpush1.bf16.msra.mxu0 %v190
    %204 = vmatprep.subr.bf16.mxu0 0
    %205 = vmatpush1.bf16.msra.mxu0 %v189
    %206 = vmatprep.subr.bf16.mxu0 0
    %207 = vmatpush1.bf16.msra.mxu0 %v188
    %208 = vmatprep.subr.bf16.mxu0 0
    %209 = vmatpush1.bf16.msra.mxu0 %v187
    %210 = vmatprep.subr.bf16.mxu0 0
    %211 = vmatpush1.bf16.msra.mxu0 %v186
    %212 = vmatprep.subr.bf16.mxu0 0
    %213 = vmatpush1.bf16.msra.mxu0 %v185
    %214 = vmatprep.subr.bf16.mxu0 0
    %215 = vmatpush1.bf16.msra.mxu0 %v184
    %216 = vmatprep.subr.bf16.mxu0 0
    %217 = vmatpush2.bf16.msra.mxu0 0
    %218 = vmatprep.subr.bf16.mxu0 0
    %219 = vmatpush2.bf16.msra.mxu0 0
    %220 = vmatprep.subr.bf16.mxu0 0
    %221 = vmatpush2.bf16.msra.mxu0 0
    %222 = vmatprep.subr.bf16.mxu0 0
    %223 = vmatpush2.bf16.msra.mxu0 0
    %224 = vmatprep.subr.bf16.mxu0 0
    %225 = vmatpush2.bf16.msra.mxu0 0
    %226 = vmatprep.subr.bf16.mxu0 0
    %227 = vmatpush2.bf16.msra.mxu0 0
    %228 = vmatprep.subr.bf16.mxu0 0
    %229 = vmatpush2.bf16.msra.mxu0 0
    %230 = vmatprep.subr.bf16.mxu0 0
    %231 = vmatpush2.bf16.msra.mxu0 0
    %232 = vmatprep.mubr.bf16.mxu0 0
    %233 = vmatmul.mubr.bf16.gmra.mxu0 %v128
    %v234 = vpop.f32.mrf.mxu0
    %v235 = vadd.f32 %v150, %v234
    %v236 = vpop.f32.mrf.mxu0
    %v237 = vpop.f32.mrf.mxu0
    %v238 = vadd.f32 %v150, %v237
    %v239 = vpop.f32.mrf.mxu0
    %240 = vdwg.mxu0
    %v241 = vpack.c.bf16 %v238, %v235
    %v243 = vunpack.c.l.b16 %v241
    %v244 = vunpack.c.h.b16 %v241
    %v245 = vpack.c.b16 %v243, %v243
    %v246 = vpack.c.b16 %v244, %v244
    %249 = vst [vmem:[#allocation8] sm:$0xf] %v245
    %250 = vst [vmem:[#allocation8 + $0x4] sm:$0xf] %v246
    // Predicated region
    $region34: #{tpu_custom_call.1} parent=1 // pred_check
      _
    $region35: #{tpu_custom_call.1} parent=1 // pred_check_branch
      %252 = sbr.rel (0) target = $region37
    $region36: #{tpu_custom_call.1} parent=1 // pred_region
      %s254 = ssub.s32 128, 128
      %255 = vsyncadd [#allocation4], %s254
      %s256 = sshll.u32 [#allocation8], 4
      %s257 = int_to_ptr.vmem [resolvable:$true] %s256
      %262 = dma.vmem_to_hbm [thread:$0]  %s257, 128, %s5, [#allocation4], 64, 64, 4
    $region37: #{tpu_custom_call.1} parent=1 // pred_fallthru
      _
    // Predicated region
    $region38: #{tpu_custom_call.1} parent=1 // pred_check
      _
    $region39: #{tpu_custom_call.1} parent=1 // pred_check_branch
      %264 = sbr.rel (0) target = $region41
    $region40: #{tpu_custom_call.1} parent=1 // pred_region
      %265 = dma.done [#allocation4], 128
    $region41: #{tpu_custom_call.1} parent=1 // pred_fallthru
      _
    %266 = vsyncpa [#allocation3], 1
    %267 = vsyncpa [#allocation6], 1
    %268 = vsyncpa [#allocation4], 1

</llo_original>
